<compile_context>
chip_gen: v5e
topology: v5e:2x2
jax: 0.10.0
libtpu: 0.0.40
codegen_flags: <defaults>
</compile_context>

<pallas_src>
from functools import partial

import jax
import jax.numpy as jnp
from jax import lax
from jax.experimental import pallas as pl
from jax.experimental.pallas import tpu as pltpu

EPS = 1e-6


def gem_kernel(p_ref, x_ref, o_ref, *, hw, p_static):
    # p_ref: SMEM (1,) scalar | x_ref: (TM, HW) VMEM tile | o_ref: (TM, 1) VMEM
    x = x_ref[...].astype(jnp.float32)        # native-dtype DMA, in-kernel cast
    xc = jnp.maximum(x, EPS)                  # clamp(min=eps)

    if p_static is not None:
        # VPU fast path: exp-by-squaring for integer p (no per-element EUP ops)
        xp = lax.integer_pow(xc, p_static)
        inv_p = jnp.float32(1.0 / p_static)
    else:
        # dynamic (learnable / traced) p: x**p = exp(p * log(x)) on the EUP
        p = p_ref[0]
        xp = jnp.exp(p * jnp.log(xc))
        inv_p = 1.0 / p

    m = jnp.sum(xp, axis=-1, keepdims=True) * jnp.float32(1.0 / hw)  # true mean
    # final root is per-row only (tm values) -> negligible EUP cost
    o_ref[...] = jnp.exp(jnp.log(m) * inv_p)


def _concrete_scalar(p):
    """float(p) if p is a concrete (non-traced) scalar value, else None."""
    if isinstance(p, (int, float)):
        return float(p)
    try:
        if isinstance(p, jax.core.Tracer):
            return None
        return float(jnp.asarray(p).reshape(-1)[0])
    except Exception:
        return None


def gem_pallas(x, p):
    """x: (N, C, H, W) float array (f32 or bf16); p: scalar or shape-(1,) param."""
    N, C, H, W = x.shape
    NC, HW = N * C, H * W
    x2 = x.reshape(NC, HW)                    # rows -> sublanes, HW -> lanes

    # --- static integer-p dispatch (default p=3 hits the VPU fast path) -------
    p_val = _concrete_scalar(p)
    p_static = None
    if p_val is not None and p_val == round(p_val) and 1.0 <= p_val <= 16.0:
        p_static = int(round(p_val))

    # --- row-tile size: ~8 MiB per (double-buffered) input buffer -------------
    itemsize = jnp.dtype(x2.dtype).itemsize
    bytes_per_row = HW * itemsize
    budget_per_buf = 8 * 1024 * 1024
    tm_cap = max(8, (budget_per_buf // bytes_per_row) // 8 * 8)
    # keep >= ~4 grid steps when the input is large enough (pipelining + v7x TCs)
    tm_steps = max(8, pl.cdiv(pl.cdiv(NC, 4), 8) * 8)
    tm = int(min(tm_cap, tm_steps))
    grid = pl.cdiv(NC, tm)                    # ragged last block handled by Pallas

    p_arr = jnp.asarray(p, jnp.float32).reshape(1)
    kernel = partial(gem_kernel, hw=HW, p_static=p_static)

    out = pl.pallas_call(
        kernel,
        out_shape=jax.ShapeDtypeStruct((NC, 1), jnp.float32),
        grid_spec=pltpu.PrefetchScalarGridSpec(
            num_scalar_prefetch=0,
            grid=(grid,),
            in_specs=[
                pl.BlockSpec(memory_space=pltpu.SMEM),       # p (scalar)
                pl.BlockSpec((tm, HW), lambda i: (i, 0)),    # row tile, full HW
            ],
            out_specs=pl.BlockSpec((tm, 1), lambda i: (i, 0)),
        ),
        compiler_params=pltpu.CompilerParams(
            dimension_semantics=("parallel",),   # shard rows across TCs on v7x
            vmem_limit_bytes=32 * 1024 * 1024,   # safe on v5e/v6e/v7x
        ),
    )(p_arr, x2)

    return out.reshape(N, C, 1, 1).astype(x.dtype)


def gem_reference(x, p):
    xc = jnp.maximum(x.astype(jnp.float32), EPS)
    pooled = jnp.mean(xc ** p, axis=(-2, -1), keepdims=True)
    return (pooled ** (1.0 / p)).astype(x.dtype)


if __name__ == "__main__":
    key = jax.random.PRNGKey(0)

    # Test 1: module-sized input, default p=3 (static integer fast path).
    x = jax.random.uniform(key, (2, 4, 16, 16), dtype=jnp.float32,
                           minval=0.0, maxval=2.0)
    p_param = jnp.ones((1,), jnp.float32) * 3.0   # GeM.__init__: ones(1)*3
    y = gem_pallas(x, p_param)
    jax.block_until_ready(y)
    y_ref = gem_reference(x, 3.0)
    assert y.shape == (2, 4, 1, 1), y.shape
    assert jnp.allclose(y, y_ref, rtol=1e-4, atol=1e-5), (
        float(jnp.max(jnp.abs(y - y_ref))))

    # Test 2: non-aligned shape (7x7 feature map, odd channel count, ragged grid).
    key2 = jax.random.PRNGKey(1)
    x2 = jax.random.uniform(key2, (2, 5, 7, 7), dtype=jnp.float32,
                            minval=0.0, maxval=2.0)
    y2 = gem_pallas(x2, p_param)
    jax.block_until_ready(y2)
    y2_ref = gem_reference(x2, 3.0)
    assert y2.shape == (2, 5, 1, 1), y2.shape
    assert jnp.allclose(y2, y2_ref, rtol=1e-4, atol=1e-5), (
        float(jnp.max(jnp.abs(y2 - y2_ref))))

    # Test 3: non-integer p exercises the dynamic (SMEM-scalar, EUP) path.
    p_dyn = jnp.ones((1,), jnp.float32) * 2.5
    y3 = gem_pallas(x, p_dyn)
    jax.block_until_ready(y3)
    y3_ref = gem_reference(x, 2.5)
    assert y3.shape == (2, 4, 1, 1), y3.shape
    assert jnp.allclose(y3, y3_ref, rtol=1e-4, atol=1e-5), (
        float(jnp.max(jnp.abs(y3 - y3_ref))))

    print("KERNEL_OK")
</pallas_src>

<mosaic_0001>
module attributes {stable_mosaic.version = 11 : i64} {
  func.func @gem_kernel(%arg0: i32, %arg1: memref<1xf32, #tpu.memory_space<smem>>, %arg2: memref<8x256xf32, #tpu.memory_space<vmem>>, %arg3: memref<8x1xf32, #tpu.memory_space<vmem>>) attributes {dimension_semantics = [#tpu.dimension_semantics<parallel>], iteration_bounds = array<i64: 1>, scalar_prefetch = 0 : i64, scratch_operands = 0 : i64, tpu.core_type = #tpu.core_type<tc>, window_params = [{transform_indices = @transform_0, window_bounds = array<i64: 1>}, {transform_indices = @transform_1, window_bounds = array<i64: 8, 256>}, {transform_indices = @transform_2, window_bounds = array<i64: 8, 1>}]} {
    %c0 = arith.constant 0 : index
    %c0_0 = arith.constant 0 : index
    %0 = vector.load %arg2[%c0, %c0_0] : memref<8x256xf32, #tpu.memory_space<vmem>>, vector<8x256xf32>
    %cst = arith.constant 9.99999997E-7 : f32
    %1 = vector.broadcast %cst : f32 to vector<8x256xf32>
    %2 = arith.maximumf %0, %1 : vector<8x256xf32>
    %3 = arith.mulf %2, %2 : vector<8x256xf32>
    %4 = arith.mulf %2, %3 : vector<8x256xf32>
    %cst_1 = arith.constant dense<0.000000e+00> : vector<8xf32>
    %5 = vector.multi_reduction <add>, %4, %cst_1 [1] : vector<8x256xf32> to vector<8xf32>
    %6 = vector.shape_cast %5 : vector<8xf32> to vector<8x1xf32>
    %cst_2 = arith.constant 3.906250e-03 : f32
    %7 = vector.broadcast %cst_2 : f32 to vector<8x1xf32>
    %8 = arith.mulf %6, %7 : vector<8x1xf32>
    %9 = math.log %8 : vector<8x1xf32>
    %cst_3 = arith.constant 0.333333343 : f32
    %10 = vector.broadcast %cst_3 : f32 to vector<8x1xf32>
    %11 = arith.mulf %9, %10 : vector<8x1xf32>
    %12 = math.exp %11 : vector<8x1xf32>
    %c0_4 = arith.constant 0 : index
    %c0_5 = arith.constant 0 : index
    %13 = vector.load %arg3[%c0_4, %c0_5] : memref<8x1xf32, #tpu.memory_space<vmem>>, vector<8x1xf32>
    tpu.vector_store %arg3[%c0_4, %c0_5], %12 {strides = array<i32>} : memref<8x1xf32, #tpu.memory_space<vmem>>, vector<8x1xf32>,
    return
  }
  func.func @transform_0(%arg0: i32) -> i32 {
    %c0_i32 = arith.constant 0 : i32
    %c0_i32_0 = arith.constant 0 : i32
    return %c0_i32 : i32
  }
  func.func @transform_1(%arg0: i32) -> (i32, i32) {
    %c0_i32 = arith.constant 0 : i32
    %c0_i32_0 = arith.constant 0 : i32
    return %arg0, %c0_i32 : i32, i32
  }
  func.func @transform_2(%arg0: i32) -> (i32, i32) {
    %c0_i32 = arith.constant 0 : i32
    %c0_i32_0 = arith.constant 0 : i32
    return %arg0, %c0_i32 : i32, i32
  }
}

</mosaic_0001>

<llo_original>
// kernel: tpu_custom_call.1
$region0: #{tpu_custom_call.1}
  #allocation0 [shape = 'u32[]', space=smem, size = 0x4, offset = 0x4, fixed_abs, tag = 'smem constant byte address 0x4 - core index']
  #allocation1 [shape = 'u32[72,128]{1,0:T(1,128)}', space=vmem, size = 0x9000, scoped, tag = 'internal scratch']
  #allocation2 [shape = 'f32[1]{0:T(128)S(6)}', space=smem, size = 0x200, scoped, tag = 'scoped memory for tpu_custom_call.1']
  %s0 = inlined_call_operand.<no memory space> [shape: f32[1], index: 0, kind: input, shape index: {}]
  %s1 = inlined_call_operand.hbm [shape: f32[8,256], index: 1, kind: input, shape index: {}]
  %s2 = inlined_call_operand.vmem [shape: f32[8,1], index: 2, kind: output, shape index: {}]
  %s3 = sld [smem:[#allocation0]]
  $region22: #{tpu_custom_call.1} parent=0
    _
  %s5 = ssub.s32 1, %s3
  %s6 = scalar_select 0, %s5, %s3
  %7 = sst [smem:[#allocation2]] %s0
  $region1: #{tpu_custom_call.1} parent=0
    #allocation3 [shape = 'u8[8192]{0}', space=vmem, size = 0x2000, scoped, tag = 'input window, operand 1, single buffered']
    #allocation4 [shape = 's32[1]{0}', space=sflag, size = 0x4, scoped, tag = 'scoped memory for tpu_custom_call.1']
    %8 = vsyncpa [#allocation4], 0
    // Predicated region
    $region2: #{tpu_custom_call.1} parent=1 // pred_check
      _
    $region3: #{tpu_custom_call.1} parent=1 // pred_check_branch
      %10 = sbr.rel (0) target = $region5
    $region4: #{tpu_custom_call.1} parent=1 // pred_region
      _
    $region5: #{tpu_custom_call.1} parent=1 // pred_fallthru
      _
    // Predicated region
    $region6: #{tpu_custom_call.1} parent=1 // pred_check
      _
    $region7: #{tpu_custom_call.1} parent=1 // pred_check_branch
      %12 = sbr.rel (0) target = $region9
    $region8: #{tpu_custom_call.1} parent=1 // pred_region
      %14 = vsyncadd [#allocation4], 0
      %s16 = sshll.u32 %s1, 4
      %s17 = int_to_ptr.hbm [resolvable:$true] %s16
      %s18 = sshll.u32 [#allocation3], 4
      %s19 = int_to_ptr.vmem [resolvable:$true] %s18
      %21 = dma.hbm_to_vmem [thread:$0]  %s17, 256, %s19, [#allocation4]
    $region9: #{tpu_custom_call.1} parent=1 // pred_fallthru
      _
    // Predicated region
    $region10: #{tpu_custom_call.1} parent=1 // pred_check
      _
    $region11: #{tpu_custom_call.1} parent=1 // pred_check_branch
      %23 = sbr.rel (0) target = $region13
    $region12: #{tpu_custom_call.1} parent=1 // pred_region
      %25 = dma.done [#allocation4], 256
    $region13: #{tpu_custom_call.1} parent=1 // pred_fallthru
      _
    %v26 = vld [vmem:[#allocation3] sm:$0xff]
    %v27 = vld [vmem:[#allocation3 + $0x8] sm:$0xff]
    %v28 = vmax.f32 %v26, 1e-06
    %v29 = vmax.f32 %v27, 1e-06
    %v30 = vmul.f32 %v28, %v28
    %v31 = vmul.f32 %v29, %v29
    %v32 = vmul.f32 %v28, %v30
    %v33 = vmul.f32 %v29, %v31
    %v34 = vadd.f32 %v32, %v33
    %35 = vadd.xlane.f32.xlu0 %v34
    %v36 = vpop.xlane.xlu0 %35
    %v37 = vmul.f32 %v36, 0.00390625
    %v38 = vlog2.pop %v37
    %v39 = vmul.f32 %v38, 0.6931472
    %v40 = vmul.f32 %v39, 0.33333334
    %v41 = vmul.f32 %v40, 1.442695
    %v42 = vpow.pop %v41
    %vm43 = vcmask 7168
    %44 = vst.msk [vmem:[%s2] sm:$0xff] %vm43, %v42
    // Predicated region
    $region14: #{tpu_custom_call.1} parent=1 // pred_check
      _
    $region15: #{tpu_custom_call.1} parent=1 // pred_check_branch
      %46 = sbr.rel (0) target = $region17
    $region16: #{tpu_custom_call.1} parent=1 // pred_region
      _
    $region17: #{tpu_custom_call.1} parent=1 // pred_fallthru
      _
    // Predicated region
    $region18: #{tpu_custom_call.1} parent=1 // pred_check
      _
    $region19: #{tpu_custom_call.1} parent=1 // pred_check_branch
      %48 = sbr.rel (0) target = $region21
    $region20: #{tpu_custom_call.1} parent=1 // pred_region
      _
    $region21: #{tpu_custom_call.1} parent=1 // pred_fallthru
      _
    %49 = vsyncpa [#allocation4], 1

</llo_original>
